<compile_context>
chip_gen: v5e
topology: v5e:2x2
jax: 0.10.0
libtpu: 0.0.40
codegen_flags: <defaults>
</compile_context>

<pallas_src>
import functools

import jax
import jax.numpy as jnp
from jax.experimental import pallas as pl
from jax.experimental.pallas import tpu as pltpu


IGNORE_INDEX = -100  # nn.NLLLoss default


def _round_up(x: int, m: int) -> int:
    return ((x + m - 1) // m) * m


def _nll_partial_kernel(logits_ref, targets_ref, out_ref, *, tile_c: int):
    """Accumulates per-N-block sums of logits[row, target[row]] into out_ref.

    logits_ref : (TILE_N, TILE_C) native-dtype log-probs (upcast to f32 here)
    targets_ref: (TILE_N, 1) int32 class indices; ignore / pad rows hold -1
    out_ref    : (1, 8, 128) f32 partial-sum block, resident across the C axis
    """
    j = pl.program_id(1)  # C-tile index (accumulation axis, last, "arbitrary")

    @pl.when(j == 0)
    def _init():
        out_ref[...] = jnp.zeros_like(out_ref)

    logits = logits_ref[...].astype(jnp.float32)      # f32 accumulation
    targets = targets_ref[...]                        # (TN, 1) int32
    tn, tc = logits.shape

    # Class ids covered by THIS C tile.  Rows whose target is -1 (ignore /
    # row-padding) and lanes past the true C (edge tile) can never match a
    # valid target, so they contribute exactly 0 — no logits padding needed
    # and any out-of-bounds garbage (even NaN) is squashed by the select.
    class_ids = j * tile_c + jax.lax.broadcasted_iota(jnp.int32, (tn, tc), 1)
    picked = jnp.where(class_ids == targets, logits, 0.0)  # (TN, TC)

    # Reduce to an (8, 128)-aligned partial without cross-lane relayout:
    #   1) fold sublane groups of 8 rows (layout-trivial reshape + vreg adds)
    part = jnp.sum(picked.reshape(tn // 8, 8, tc), axis=0)   # (8, TC)
    #   2) fold 128-lane groups with static, lane-aligned slices (<= 15 adds)
    acc = part[:, 0:128]
    for g in range(1, tc // 128):
        acc = acc + part[:, g * 128:(g + 1) * 128]           # (8, 128)

    out_ref[...] += acc[None]                                # (1, 8, 128)


def predict_log_vars_model_loss(decoder_outputs, target_symbols_idxs,
                                ignore_index: int = IGNORE_INDEX):
    """JAX/Pallas equivalent of PredictLogVarsModelLoss.forward.

    decoder_outputs:     (B, T, C) float (f32 or bf16) log-probabilities
    target_symbols_idxs: (B, T+1)  int   symbol indices (first token dropped)
    returns: scalar float32 loss
    """
    assert decoder_outputs.ndim == 3
    assert target_symbols_idxs.ndim == 2
    B, T, C = decoder_outputs.shape
    assert target_symbols_idxs.shape[0] == B
    assert target_symbols_idxs.shape[1] == T + 1
    N = B * T
    assert N > 0

    logits = decoder_outputs.reshape(N, C)                       # native dtype
    targets = target_symbols_idxs[:, 1:].reshape(N).astype(jnp.int32)

    # Valid-row count (NLLLoss ignore_index semantics) — tiny, stays in XLA.
    num_valid = jnp.sum((targets != ignore_index).astype(jnp.float32))
    # Normalize ignored rows to -1 so the in-kernel class-id compare can never
    # match them (robust even for a non-negative custom ignore_index).
    targets = jnp.where(targets == ignore_index, jnp.int32(-1), targets)

    # ---- tile selection -----------------------------------------------------
    k = pl.cdiv(C, 128)                               # 128-lane slabs covering C
    slabs = max(d for d in range(1, 17) if k % d == 0)
    TILE_C = 128 * slabs                              # <= 2048 lanes
    grid_c = k // slabs

    itemsize = jnp.dtype(logits.dtype).itemsize
    tile_bytes = 2 * 1024 * 1024                      # ~2 MiB native bytes/tile
    rows_budget = max(8, (tile_bytes // (TILE_C * itemsize)) // 8 * 8)
    TILE_N = int(min(4096, rows_budget, _round_up(N, 8)))

    grid_n = pl.cdiv(N, TILE_N)
    N_round = grid_n * TILE_N

    # Only the tiny int32 target column ever gets padded (N*4 bytes); the big
    # (N, C) logits tensor is consumed unpadded in its native dtype.
    if N_round != N:
        targets = jnp.pad(targets, ((0, N_round - N),), constant_values=-1)
    targets_2d = targets.reshape(N_round, 1)

    kernel = functools.partial(_nll_partial_kernel, tile_c=TILE_C)

    partials = pl.pallas_call(
        kernel,
        out_shape=jax.ShapeDtypeStruct((grid_n, 8, 128), jnp.float32),
        grid=(grid_n, grid_c),
        in_specs=[
            pl.BlockSpec((TILE_N, TILE_C), lambda i, j: (i, j)),   # logits
            pl.BlockSpec((TILE_N, 1), lambda i, j: (i, 0)),        # targets
        ],
        out_specs=pl.BlockSpec((1, 8, 128), lambda i, j: (i, 0, 0)),
        compiler_params=pltpu.CompilerParams(
            dimension_semantics=("parallel", "arbitrary"),
            vmem_limit_bytes=32 * 1024 * 1024,
        ),
        cost_estimate=pl.CostEstimate(
            flops=3 * N * C,
            transcendentals=0,
            bytes_accessed=N * C * itemsize + N_round * 4
            + grid_n * 8 * 128 * 4,
        ),
    )(logits, targets_2d)

    total_picked = jnp.sum(partials)
    return -(total_picked / num_valid)


def _reference(decoder_outputs, target_symbols_idxs, ignore_index=IGNORE_INDEX):
    B, T, C = decoder_outputs.shape
    lf = decoder_outputs.astype(jnp.float32).reshape(B * T, C)
    t = target_symbols_idxs[:, 1:].reshape(-1)
    valid = t != ignore_index
    picked = lf[jnp.arange(B * T), jnp.where(valid, t, 0)]
    return -jnp.sum(jnp.where(valid, picked, 0.0)) / jnp.sum(valid)


if __name__ == "__main__":
    key = jax.random.PRNGKey(0)

    # ---- check 1: f32, aligned shapes, all targets valid --------------------
    B, T, C = 4, 8, 128
    k1, k2, key = jax.random.split(key, 3)
    raw = jax.random.normal(k1, (B, T, C), dtype=jnp.float32)
    decoder_outputs = jax.nn.log_softmax(raw, axis=-1)
    tgt = jax.random.randint(k2, (B, T + 1), 0, C, dtype=jnp.int32)

    loss = jax.block_until_ready(predict_log_vars_model_loss(decoder_outputs, tgt))
    ref = _reference(decoder_outputs, tgt)
    assert jnp.allclose(loss, ref, rtol=1e-5, atol=1e-5), (loss, ref)

    # ---- check 2: bf16 inputs (native-dtype read, f32 in-kernel accumulate) -
    do_bf16 = decoder_outputs.astype(jnp.bfloat16)
    loss_bf16 = jax.block_until_ready(predict_log_vars_model_loss(do_bf16, tgt))
    ref_bf16 = _reference(do_bf16, tgt)
    assert jnp.allclose(loss_bf16, ref_bf16, rtol=1e-5, atol=1e-5), (loss_bf16, ref_bf16)

    # ---- check 3: ignore_index (-100) rows excluded from the mean -----------
    tgt_ign = tgt.at[0, 3].set(-100).at[2, 5].set(-100)
    loss_ign = jax.block_until_ready(
        predict_log_vars_model_loss(decoder_outputs, tgt_ign))
    ref_ign = _reference(decoder_outputs, tgt_ign)
    assert jnp.allclose(loss_ign, ref_ign, rtol=1e-5, atol=1e-5), (loss_ign, ref_ign)

    # ---- check 4: ragged N and C (no logits padding; edge rows/lanes masked)
    B2, T2, C2 = 3, 7, 200
    k3, k4, key = jax.random.split(key, 3)
    do2 = jax.nn.log_softmax(
        jax.random.normal(k3, (B2, T2, C2), dtype=jnp.float32), axis=-1)
    tgt2 = jax.random.randint(k4, (B2, T2 + 1), 0, C2, dtype=jnp.int32)
    tgt2 = tgt2.at[1, 4].set(-100)
    loss2 = jax.block_until_ready(predict_log_vars_model_loss(do2, tgt2))
    ref2 = _reference(do2, tgt2)
    assert jnp.allclose(loss2, ref2, rtol=1e-5, atol=1e-5), (loss2, ref2)

    # ---- check 5: C forcing a multi-step accumulation along the C grid axis -
    B3, T3, C3 = 2, 3, 2176          # 2176 = 128 * 17 -> TILE_C=128, grid_c=17
    k5, k6, key = jax.random.split(key, 3)
    do3 = jax.nn.log_softmax(
        jax.random.normal(k5, (B3, T3, C3), dtype=jnp.float32), axis=-1)
    tgt3 = jax.random.randint(k6, (B3, T3 + 1), 0, C3, dtype=jnp.int32)
    loss3 = jax.block_until_ready(predict_log_vars_model_loss(do3, tgt3))
    ref3 = _reference(do3, tgt3)
    assert jnp.allclose(loss3, ref3, rtol=1e-5, atol=1e-5), (loss3, ref3)

    print("KERNEL_OK")
</pallas_src>

<mosaic_0001>
module attributes {stable_mosaic.version = 11 : i64} {
  func.func @_nll_partial_kernel(%arg0: i32, %arg1: i32, %arg2: memref<32x128xf32, #tpu.memory_space<vmem>>, %arg3: memref<32x1xi32, #tpu.memory_space<vmem>>, %arg4: memref<1x8x128xf32, #tpu.memory_space<vmem>>) attributes {dimension_semantics = [#tpu.dimension_semantics<parallel>, #tpu.dimension_semantics<arbitrary>], iteration_bounds = array<i64: 1, 1>, scalar_prefetch = 0 : i64, scratch_operands = 0 : i64, tpu.core_type = #tpu.core_type<tc>, window_params = [{transform_indices = @transform_0, window_bounds = array<i64: 32, 128>}, {transform_indices = @transform_1, window_bounds = array<i64: 32, 1>}, {transform_indices = @transform_2, window_bounds = array<i64: 1, 8, 128>}]} {
    %c0_i32 = arith.constant 0 : i32
    %0 = arith.cmpi eq, %arg1, %c0_i32 : i32
    %1 = arith.extui %0 : i1 to i32
    %c0_i32_0 = arith.constant 0 : i32
    %2 = arith.cmpi ne, %1, %c0_i32_0 : i32
    scf.if %2 {
      %cst_11 = arith.constant 0.000000e+00 : f32
      %19 = vector.broadcast %cst_11 : f32 to vector<1x8x128xf32>
      %c0_12 = arith.constant 0 : index
      %c0_13 = arith.constant 0 : index
      %c0_14 = arith.constant 0 : index
      %20 = vector.load %arg4[%c0_12, %c0_13, %c0_14] : memref<1x8x128xf32, #tpu.memory_space<vmem>>, vector<1x8x128xf32>
      tpu.vector_store %arg4[%c0_12, %c0_13, %c0_14], %19 {strides = array<i32>} : memref<1x8x128xf32, #tpu.memory_space<vmem>>, vector<1x8x128xf32>,
    } else {
    }
    %c0 = arith.constant 0 : index
    %c0_1 = arith.constant 0 : index
    %3 = vector.load %arg2[%c0, %c0_1] : memref<32x128xf32, #tpu.memory_space<vmem>>, vector<32x128xf32>
    %c0_2 = arith.constant 0 : index
    %c0_3 = arith.constant 0 : index
    %4 = vector.load %arg3[%c0_2, %c0_3] : memref<32x1xi32, #tpu.memory_space<vmem>>, vector<32x1xi32>
    %c128_i32 = arith.constant 128 : i32
    %5 = arith.muli %arg1, %c128_i32 : i32
    %6 = tpu.iota {dimensions = array<i32: 1>} : vector<32x128xi32>
    %7 = vector.broadcast %5 : i32 to vector<32x128xi32>
    %8 = arith.addi %7, %6 : vector<32x128xi32>
    %9 = vector.broadcast %4 : vector<32x1xi32> to vector<32x128xi32>
    %10 = arith.cmpi eq, %8, %9 : vector<32x128xi32>
    %cst = arith.constant 0.000000e+00 : f32
    %11 = vector.broadcast %cst : f32 to vector<32x128xf32>
    %12 = arith.select %10, %3, %11 : vector<32x128xi1>, vector<32x128xf32>
    %13 = vector.shape_cast %12 : vector<32x128xf32> to vector<4x8x128xf32>
    %cst_4 = arith.constant dense<0.000000e+00> : vector<8x128xf32>
    %14 = vector.multi_reduction <add>, %13, %cst_4 [0] : vector<4x8x128xf32> to vector<8x128xf32>
    %c0_5 = arith.constant 0 : index
    %c0_6 = arith.constant 0 : index
    %c0_7 = arith.constant 0 : index
    %15 = vector.load %arg4[%c0_5, %c0_6, %c0_7] : memref<1x8x128xf32, #tpu.memory_space<vmem>>, vector<1x8x128xf32>
    %16 = vector.shape_cast %14 : vector<8x128xf32> to vector<1x8x128xf32>
    %17 = arith.addf %15, %16 : vector<1x8x128xf32>
    %c0_8 = arith.constant 0 : index
    %c0_9 = arith.constant 0 : index
    %c0_10 = arith.constant 0 : index
    %18 = vector.load %arg4[%c0_8, %c0_9, %c0_10] : memref<1x8x128xf32, #tpu.memory_space<vmem>>, vector<1x8x128xf32>
    tpu.vector_store %arg4[%c0_8, %c0_9, %c0_10], %17 {strides = array<i32>} : memref<1x8x128xf32, #tpu.memory_space<vmem>>, vector<1x8x128xf32>,
    return
  }
  func.func @transform_0(%arg0: i32, %arg1: i32) -> (i32, i32) {
    %c0_i32 = arith.constant 0 : i32
    return %arg0, %arg1 : i32, i32
  }
  func.func @transform_1(%arg0: i32, %arg1: i32) -> (i32, i32) {
    %c0_i32 = arith.constant 0 : i32
    %c0_i32_0 = arith.constant 0 : i32
    return %arg0, %c0_i32 : i32, i32
  }
  func.func @transform_2(%arg0: i32, %arg1: i32) -> (i32, i32, i32) {
    %c0_i32 = arith.constant 0 : i32
    %c0_i32_0 = arith.constant 0 : i32
    %c0_i32_1 = arith.constant 0 : i32
    return %arg0, %c0_i32, %c0_i32_0 : i32, i32, i32
  }
}

</mosaic_0001>

<llo_original>
// kernel: tpu_custom_call.1
$region0: #{tpu_custom_call.1}
  #allocation0 [shape = 'u32[]', space=smem, size = 0x4, offset = 0x4, fixed_abs, tag = 'smem constant byte address 0x4 - core index']
  #allocation1 [shape = 'u32[72,128]{1,0:T(1,128)}', space=vmem, size = 0x9000, scoped, tag = 'internal scratch']
  %s0 = inlined_call_operand.vmem [shape: f32[32,128], index: 0, kind: input, shape index: {}]
  %s1 = inlined_call_operand.vmem [shape: s32[32,1], index: 1, kind: input, shape index: {}]
  %s2 = inlined_call_operand.hbm [shape: f32[1,8,128], index: 2, kind: output, shape index: {}]
  %s3 = sld [smem:[#allocation0]]
  $region22: #{tpu_custom_call.1} parent=0
    _
  %s5 = ssub.s32 1, %s3
  %s6 = scalar_select 0, %s5, %s3
  $region1: #{tpu_custom_call.1} parent=0
    #allocation2 [shape = 'u8[4096]{0}', space=vmem, size = 0x1000, scoped, tag = 'output window, operand 0, single buffered']
    #allocation3 [shape = 's32[1]{0}', space=sflag, size = 0x4, scoped, tag = 'scoped memory for tpu_custom_call.1']
    %7 = vsyncpa [#allocation3], 0
    // Predicated region
    $region2: #{tpu_custom_call.1} parent=1 // pred_check
      _
    $region3: #{tpu_custom_call.1} parent=1 // pred_check_branch
      %9 = sbr.rel (0) target = $region5
    $region4: #{tpu_custom_call.1} parent=1 // pred_region
      _
    $region5: #{tpu_custom_call.1} parent=1 // pred_fallthru
      _
    // Predicated region
    $region6: #{tpu_custom_call.1} parent=1 // pred_check
      _
    $region7: #{tpu_custom_call.1} parent=1 // pred_check_branch
      %11 = sbr.rel (0) target = $region9
    $region8: #{tpu_custom_call.1} parent=1 // pred_region
      _
    $region9: #{tpu_custom_call.1} parent=1 // pred_fallthru
      _
    %p12 = scmp.eq.s32.totalorder 0, 0
    // Predicated region
    $region10: #{tpu_custom_call.1} parent=1 // pred_check
      %p13 = pneg %p12
    $region11: #{tpu_custom_call.1} parent=1 // pred_check_branch
      %15 = sbr.rel (%p13) target = $region13
    $region12: #{tpu_custom_call.1} parent=1 // pred_region
      %16 = vst [vmem:[#allocation2] sm:$0xff] 0.0
    $region13: #{tpu_custom_call.1} parent=1 // pred_fallthru
      _
    %v17 = vld [vmem:[%s0] sm:$0xff]
    %v18 = vld [vmem:[%s0 + $0x8] sm:$0xff]
    %v19 = vld [vmem:[%s0 + $0x10] sm:$0xff]
    %v20 = vld [vmem:[%s0 + $0x18] sm:$0xff]
    %v21 = vld [vmem:[%s1] sm:$0xff]
    %v22 = vld [vmem:[%s1 + $0x8] sm:$0xff]
    %v23 = vld [vmem:[%s1 + $0x10] sm:$0xff]
    %v24 = vld [vmem:[%s1 + $0x18] sm:$0xff]
    %s25 = smul.u32 0, 128
    %v26 = vlaneseq
    %v27 = vand.u32 %v26, 127
    %v28 = vstv %s25
    %v29 = vadd.s32 %v28, %v27
    %30 = vset.pattern.permute.xlu0 0
    %31 = vperm.xlu0 %30, %v21
    %v32 = vpop.permute.xlu0 %31
    %33 = vset.pattern.permute.xlu0 0
    %34 = vperm.xlu0 %33, %v22
    %v35 = vpop.permute.xlu0 %34
    %36 = vset.pattern.permute.xlu0 0
    %37 = vperm.xlu0 %36, %v23
    %v38 = vpop.permute.xlu0 %37
    %39 = vset.pattern.permute.xlu0 0
    %40 = vperm.xlu0 %39, %v24
    %v41 = vpop.permute.xlu0 %40
    %vm42 = vcmp.eq.s32.totalorder %v29, %v32
    %vm43 = vcmp.eq.s32.totalorder %v29, %v35
    %vm44 = vcmp.eq.s32.totalorder %v29, %v38
    %vm45 = vcmp.eq.s32.totalorder %v29, %v41
    %v46 = vsel %vm42, %v17, 0.0
    %v47 = vsel %vm43, %v18, 0.0
    %v48 = vsel %vm44, %v19, 0.0
    %v49 = vsel %vm45, %v20, 0.0
    %v50 = vadd.f32 %v46, %v47
    %v51 = vadd.f32 %v50, %v48
    %v52 = vadd.f32 %v51, %v49
    %v53 = vld [vmem:[#allocation2] sm:$0xff]
    %v54 = vadd.f32 %v53, %v52
    %55 = vst [vmem:[#allocation2] sm:$0xff] %v54
    // Predicated region
    $region14: #{tpu_custom_call.1} parent=1 // pred_check
      _
    $region15: #{tpu_custom_call.1} parent=1 // pred_check_branch
      %57 = sbr.rel (0) target = $region17
    $region16: #{tpu_custom_call.1} parent=1 // pred_region
      %59 = vsyncadd [#allocation3], 0
      %s61 = sshll.u32 [#allocation2], 4
      %s62 = int_to_ptr.vmem [resolvable:$true] %s61
      %s63 = sshll.u32 %s2, 4
      %s64 = int_to_ptr.hbm [resolvable:$true] %s63
      %66 = dma.vmem_to_hbm [thread:$0]  %s62, 128, %s64, [#allocation3]
    $region17: #{tpu_custom_call.1} parent=1 // pred_fallthru
      _
    // Predicated region
    $region18: #{tpu_custom_call.1} parent=1 // pred_check
      _
    $region19: #{tpu_custom_call.1} parent=1 // pred_check_branch
      %68 = sbr.rel (0) target = $region21
    $region20: #{tpu_custom_call.1} parent=1 // pred_region
      %70 = dma.done [#allocation3], 128
    $region21: #{tpu_custom_call.1} parent=1 // pred_fallthru
      _
    %71 = vsyncpa [#allocation3], 1

</llo_original>
